<compile_context>
chip_gen: v5e
topology: v5e:2x2
jax: 0.10.0
libtpu: 0.0.40
codegen_flags: <defaults>
</compile_context>

<pallas_src>
import numpy as np
import jax
import jax.numpy as jnp
from jax.experimental import pallas as pl
from jax.experimental.pallas import tpu as pltpu

N_CLASSES = 10

# ---- packed-parameter slab layout (all row offsets 8-aligned) --------------
ROW_W1, ROW_B1 = 0, 64     # conv1 as (64, 288) dense matrix, bias (1, 288)
ROW_W2, ROW_B2 = 72, 360   # conv2 as (288, 64),              bias (1, 64)
ROW_W3, ROW_B3 = 368, 432  # conv3 as (64, 32),               bias (1, 32)
ROW_WF, ROW_BF = 440, 472  # fc1   as (32, 128) zero-padded,  bias (1, 128)
P_ROWS, P_COLS = 480, 288
OUT_LANES = 128            # lane-padded logits width


def tinycnn_kernel(x_ref, p_ref, out_ref):
    # x_ref  : (TB, 64)        flattened 8x8 single-channel image tile
    # p_ref  : (480, 288)      packed weights + biases (resident, single DMA)
    # out_ref: (TB, 128)       logits, lane-padded (cols >= n_classes are 0)
    x = x_ref[...]

    w1 = p_ref[ROW_W1:ROW_W1 + 64, :]              # (64, 288)
    b1 = p_ref[ROW_B1:ROW_B1 + 1, :]               # (1, 288)
    w2 = p_ref[ROW_W2:ROW_W2 + 288, 0:64]          # (288, 64)
    b2 = p_ref[ROW_B2:ROW_B2 + 1, 0:64]            # (1, 64)
    w3 = p_ref[ROW_W3:ROW_W3 + 64, 0:32]           # (64, 32)
    b3 = p_ref[ROW_B3:ROW_B3 + 1, 0:32]            # (1, 32)
    wf = p_ref[ROW_WF:ROW_WF + 32, 0:OUT_LANES]    # (32, 128)
    bf = p_ref[ROW_BF:ROW_BF + 1, 0:OUT_LANES]     # (1, 128)

    # conv1 (1->8, k3, s1) + ReLU : one MXU matmul, K accumulated in the MXU.
    h1 = jnp.maximum(jnp.dot(x, w1, preferred_element_type=jnp.float32) + b1, 0.0)
    # conv2 (8->16, k3, s2) + ReLU
    h2 = jnp.maximum(jnp.dot(h1, w2, preferred_element_type=jnp.float32) + b2, 0.0)
    # conv3 (16->32, k2, s1) + ReLU  (1x1 spatial output == flatten(1))
    h3 = jnp.maximum(jnp.dot(h2, w3, preferred_element_type=jnp.float32) + b3, 0.0)
    # fc1 into a lane-dense 128-wide block (unmasked store)
    out_ref[...] = jnp.dot(h3, wf, preferred_element_type=jnp.float32) + bf


def _round_up(n, m):
    return ((n + m - 1) // m) * m


def tinycnn_forward(x_nchw, packed, n_classes, block_batch=256):
    """x_nchw: (B, 1, 8, 8) f32.  packed: (480, 288) param slab."""
    B = x_nchw.shape[0]
    assert x_nchw.shape[1:] == (1, 8, 8), "TinyCNN expects (B, 1, 8, 8) inputs"
    x_flat = x_nchw.reshape(B, 64).astype(jnp.float32)   # row-major (H, W)

    # Batch tile: multiple of 8 sublanes; one tile if the batch fits, else
    # `block_batch`-row tiles (keeps padding waste and grid overhead low).
    TB = min(block_batch, _round_up(B, 8))
    Bp = _round_up(B, TB)
    if Bp != B:
        x_flat = jnp.pad(x_flat, ((0, Bp - B), (0, 0)))
    grid = (Bp // TB,)

    flops = 2 * Bp * (64 * 288 + 288 * 64 + 64 * 32 + 32 * OUT_LANES)
    bytes_accessed = 4 * (Bp * 64 + P_ROWS * P_COLS + Bp * OUT_LANES)

    out = pl.pallas_call(
        tinycnn_kernel,
        out_shape=jax.ShapeDtypeStruct((Bp, OUT_LANES), jnp.float32),
        grid_spec=pltpu.PrefetchScalarGridSpec(
            num_scalar_prefetch=0,
            grid=grid,
            in_specs=[
                pl.BlockSpec((TB, 64), lambda b: (b, 0)),          # batch tile
                pl.BlockSpec((P_ROWS, P_COLS), lambda b: (0, 0)),  # resident params
            ],
            out_specs=pl.BlockSpec((TB, OUT_LANES), lambda b: (b, 0)),
        ),
        compiler_params=pltpu.CompilerParams(
            dimension_semantics=("parallel",)),
        cost_estimate=pl.CostEstimate(flops=flops, transcendentals=0,
                                      bytes_accessed=bytes_accessed),
    )(x_flat, packed)
    return out[:B, :n_classes]


# ---------------- deterministic parameter init (torch-like uniform) --------
def _uniform(key, shape, fan_in):
    bound = 1.0 / np.sqrt(fan_in)
    return jax.random.uniform(key, shape, jnp.float32, -bound, bound)


def make_params(key, n_classes):
    ks = jax.random.split(key, 8)
    w1 = _uniform(ks[0], (8, 1, 3, 3), 1 * 3 * 3)
    b1 = _uniform(ks[1], (8,), 1 * 3 * 3)
    w2 = _uniform(ks[2], (16, 8, 3, 3), 8 * 3 * 3)
    b2 = _uniform(ks[3], (16,), 8 * 3 * 3)
    w3 = _uniform(ks[4], (32, 16, 2, 2), 16 * 2 * 2)
    b3 = _uniform(ks[5], (32,), 16 * 2 * 2)
    wf = _uniform(ks[6], (n_classes, 32), 32)
    bf = _uniform(ks[7], (n_classes,), 32)
    return (w1, b1, w2, b2, w3, b3, wf, bf)


# ---------------- pack all params into one lane/sublane-friendly slab ------
def pack_params(params, n_classes):
    w1, b1, w2, b2, w3, b3, wf, bf = [np.asarray(p, np.float32) for p in params]

    # conv1 (1->8, k3 s1, 8x8 -> 6x6) as dense (64, 288): in pixel -> out (pos, ch)
    W1 = np.zeros((64, 36 * 8), np.float32)
    for oh in range(6):
        for ow in range(6):
            col0 = (oh * 6 + ow) * 8
            for i in range(3):
                for j in range(3):
                    W1[(oh + i) * 8 + (ow + j), col0:col0 + 8] += w1[:, 0, i, j]
    B1 = np.tile(b1, 36)                                   # (288,)

    # conv2 (8->16, k3 s2, 6x6 -> 2x2) as dense (288, 64)
    W2 = np.zeros((36 * 8, 4 * 16), np.float32)
    for qh in range(2):
        for qw in range(2):
            col0 = (qh * 2 + qw) * 16
            for i in range(3):
                for j in range(3):
                    p0 = ((2 * qh + i) * 6 + (2 * qw + j)) * 8
                    W2[p0:p0 + 8, col0:col0 + 16] += w2[:, :, i, j].T  # (Cin,Cout)
    B2 = np.tile(b2, 4)                                    # (64,)

    # conv3 (16->32, k2 s1, 2x2 -> 1x1) as (64, 32):  row = (i*2+j)*16 + c
    W3 = np.transpose(w3, (2, 3, 1, 0)).reshape(64, 32)

    # fc1 (32 -> n_classes), zero-padded to 128 output lanes
    WF = np.zeros((32, OUT_LANES), np.float32)
    WF[:, :n_classes] = wf.T
    BF = np.zeros((OUT_LANES,), np.float32)
    BF[:n_classes] = bf

    P = np.zeros((P_ROWS, P_COLS), np.float32)
    P[ROW_W1:ROW_W1 + 64, :288] = W1
    P[ROW_B1, :288] = B1
    P[ROW_W2:ROW_W2 + 288, :64] = W2
    P[ROW_B2, :64] = B2
    P[ROW_W3:ROW_W3 + 64, :32] = W3
    P[ROW_B3, :32] = b3
    P[ROW_WF:ROW_WF + 32, :OUT_LANES] = WF
    P[ROW_BF, :OUT_LANES] = BF
    return jnp.asarray(P)


# ---------------- plain-JAX reference (mirrors the PyTorch forward) --------
def ref_forward(x, params):
    w1, b1, w2, b2, w3, b3, wf, bf = params
    dn = ('NCHW', 'OIHW', 'NCHW')
    y = jax.lax.conv_general_dilated(x, w1, (1, 1), 'VALID', dimension_numbers=dn)
    y = jnp.maximum(y + b1[None, :, None, None], 0.0)
    y = jax.lax.conv_general_dilated(y, w2, (2, 2), 'VALID', dimension_numbers=dn)
    y = jnp.maximum(y + b2[None, :, None, None], 0.0)
    y = jax.lax.conv_general_dilated(y, w3, (1, 1), 'VALID', dimension_numbers=dn)
    y = jnp.maximum(y + b3[None, :, None, None], 0.0)
    y = y.reshape(y.shape[0], -1)                          # flatten(1)
    return y @ wf.T + bf


if __name__ == "__main__":
    key = jax.random.PRNGKey(0)
    pkey, xkey, xkey2 = jax.random.split(key, 3)

    params = make_params(pkey, N_CLASSES)
    packed = pack_params(params, N_CLASSES)

    # Small test (B=2), matching the PyTorch module's expected input layout.
    x = jax.random.normal(xkey, (2, 1, 8, 8), jnp.float32)
    out = jax.block_until_ready(tinycnn_forward(x, packed, N_CLASSES))
    ref = ref_forward(x, params)
    np.testing.assert_allclose(np.asarray(out), np.asarray(ref),
                               rtol=1e-4, atol=1e-4)

    # Multi-tile / non-multiple batch check (exercises tiling + padding +
    # the parallel grid axis with block_batch forced small).
    xb = jax.random.normal(xkey2, (130, 1, 8, 8), jnp.float32)
    outb = jax.block_until_ready(
        tinycnn_forward(xb, packed, N_CLASSES, block_batch=64))
    refb = ref_forward(xb, params)
    np.testing.assert_allclose(np.asarray(outb), np.asarray(refb),
                               rtol=1e-4, atol=1e-4)

    print("KERNEL_OK")
</pallas_src>

<mosaic_0001>
module attributes {stable_mosaic.version = 11 : i64} {
  func.func @tinycnn_kernel(%arg0: i32, %arg1: memref<8x64xf32, #tpu.memory_space<vmem>>, %arg2: memref<480x288xf32, #tpu.memory_space<vmem>>, %arg3: memref<8x128xf32, #tpu.memory_space<vmem>>) attributes {dimension_semantics = [#tpu.dimension_semantics<parallel>], iteration_bounds = array<i64: 1>, scalar_prefetch = 0 : i64, scratch_operands = 0 : i64, tpu.core_type = #tpu.core_type<tc>, window_params = [{transform_indices = @transform_0, window_bounds = array<i64: 8, 64>}, {pipeline_mode = #tpu.pipeline_mode<synchronous>, transform_indices = @transform_1, window_bounds = array<i64: 480, 288>}, {transform_indices = @transform_2, window_bounds = array<i64: 8, 128>}]} {
    %c0 = arith.constant 0 : index
    %c0_0 = arith.constant 0 : index
    %0 = vector.load %arg1[%c0, %c0_0] : memref<8x64xf32, #tpu.memory_space<vmem>>, vector<8x64xf32>
    %c0_1 = arith.constant 0 : index
    %c0_2 = arith.constant 0 : index
    %1 = vector.load %arg2[%c0_1, %c0_2] : memref<480x288xf32, #tpu.memory_space<vmem>>, vector<64x288xf32>
    %c64 = arith.constant 64 : index
    %c0_3 = arith.constant 0 : index
    %2 = vector.load %arg2[%c64, %c0_3] : memref<480x288xf32, #tpu.memory_space<vmem>>, vector<1x288xf32>
    %c72 = arith.constant 72 : index
    %c0_4 = arith.constant 0 : index
    %3 = vector.load %arg2[%c72, %c0_4] : memref<480x288xf32, #tpu.memory_space<vmem>>, vector<288x64xf32>
    %c360 = arith.constant 360 : index
    %c0_5 = arith.constant 0 : index
    %4 = vector.load %arg2[%c360, %c0_5] : memref<480x288xf32, #tpu.memory_space<vmem>>, vector<1x64xf32>
    %c368 = arith.constant 368 : index
    %c0_6 = arith.constant 0 : index
    %5 = vector.load %arg2[%c368, %c0_6] : memref<480x288xf32, #tpu.memory_space<vmem>>, vector<64x32xf32>
    %c432 = arith.constant 432 : index
    %c0_7 = arith.constant 0 : index
    %6 = vector.load %arg2[%c432, %c0_7] : memref<480x288xf32, #tpu.memory_space<vmem>>, vector<1x32xf32>
    %c440 = arith.constant 440 : index
    %c0_8 = arith.constant 0 : index
    %7 = vector.load %arg2[%c440, %c0_8] : memref<480x288xf32, #tpu.memory_space<vmem>>, vector<32x128xf32>
    %c472 = arith.constant 472 : index
    %c0_9 = arith.constant 0 : index
    %8 = vector.load %arg2[%c472, %c0_9] : memref<480x288xf32, #tpu.memory_space<vmem>>, vector<1x128xf32>
    %cst = arith.constant dense<0.000000e+00> : vector<8x288xf32>
    %9 = tpu.matmul %0, %1, %cst {dimension_numbers = #tpu.dot_dimension_numbers<[1], [0], [0], [1], [0, 0, 1, 1], [], []>} : vector<8x64xf32>, vector<64x288xf32>, vector<8x288xf32> -> vector<8x288xf32>
    %10 = vector.broadcast %2 : vector<1x288xf32> to vector<8x288xf32>
    %11 = arith.addf %9, %10 : vector<8x288xf32>
    %cst_10 = arith.constant 0.000000e+00 : f32
    %12 = vector.broadcast %cst_10 : f32 to vector<8x288xf32>
    %13 = arith.maximumf %11, %12 : vector<8x288xf32>
    %cst_11 = arith.constant dense<0.000000e+00> : vector<8x64xf32>
    %14 = tpu.matmul %13, %3, %cst_11 {dimension_numbers = #tpu.dot_dimension_numbers<[1], [0], [0], [1], [0, 0, 1, 1], [], []>} : vector<8x288xf32>, vector<288x64xf32>, vector<8x64xf32> -> vector<8x64xf32>
    %15 = vector.broadcast %4 : vector<1x64xf32> to vector<8x64xf32>
    %16 = arith.addf %14, %15 : vector<8x64xf32>
    %cst_12 = arith.constant 0.000000e+00 : f32
    %17 = vector.broadcast %cst_12 : f32 to vector<8x64xf32>
    %18 = arith.maximumf %16, %17 : vector<8x64xf32>
    %cst_13 = arith.constant dense<0.000000e+00> : vector<8x32xf32>
    %19 = tpu.matmul %18, %5, %cst_13 {dimension_numbers = #tpu.dot_dimension_numbers<[1], [0], [0], [1], [0, 0, 1, 1], [], []>} : vector<8x64xf32>, vector<64x32xf32>, vector<8x32xf32> -> vector<8x32xf32>
    %20 = vector.broadcast %6 : vector<1x32xf32> to vector<8x32xf32>
    %21 = arith.addf %19, %20 : vector<8x32xf32>
    %cst_14 = arith.constant 0.000000e+00 : f32
    %22 = vector.broadcast %cst_14 : f32 to vector<8x32xf32>
    %23 = arith.maximumf %21, %22 : vector<8x32xf32>
    %cst_15 = arith.constant dense<0.000000e+00> : vector<8x128xf32>
    %24 = tpu.matmul %23, %7, %cst_15 {dimension_numbers = #tpu.dot_dimension_numbers<[1], [0], [0], [1], [0, 0, 1, 1], [], []>} : vector<8x32xf32>, vector<32x128xf32>, vector<8x128xf32> -> vector<8x128xf32>
    %25 = vector.broadcast %8 : vector<1x128xf32> to vector<8x128xf32>
    %26 = arith.addf %24, %25 : vector<8x128xf32>
    %c0_16 = arith.constant 0 : index
    %c0_17 = arith.constant 0 : index
    %27 = vector.load %arg3[%c0_16, %c0_17] : memref<8x128xf32, #tpu.memory_space<vmem>>, vector<8x128xf32>
    tpu.vector_store %arg3[%c0_16, %c0_17], %26 {strides = array<i32>} : memref<8x128xf32, #tpu.memory_space<vmem>>, vector<8x128xf32>,
    return
  }
  func.func @transform_0(%arg0: i32) -> (i32, i32) {
    %c0_i32 = arith.constant 0 : i32
    %c0_i32_0 = arith.constant 0 : i32
    return %arg0, %c0_i32 : i32, i32
  }
  func.func @transform_1(%arg0: i32) -> (i32, i32) {
    %c0_i32 = arith.constant 0 : i32
    %c0_i32_0 = arith.constant 0 : i32
    %c0_i32_1 = arith.constant 0 : i32
    return %c0_i32, %c0_i32_0 : i32, i32
  }
  func.func @transform_2(%arg0: i32) -> (i32, i32) {
    %c0_i32 = arith.constant 0 : i32
    %c0_i32_0 = arith.constant 0 : i32
    return %arg0, %c0_i32 : i32, i32
  }
}

</mosaic_0001>

<llo_original>
// kernel: tpu_custom_call.1
$region0: #{tpu_custom_call.1}
  #allocation0 [shape = 'u32[]', space=smem, size = 0x4, offset = 0x4, fixed_abs, tag = 'smem constant byte address 0x4 - core index']
  #allocation1 [shape = 'u32[72,128]{1,0:T(1,128)}', space=vmem, size = 0x9000, scoped, tag = 'internal scratch']
  %s0 = inlined_call_operand.vmem [shape: f32[8,64], index: 0, kind: input, shape index: {}]
  %s1 = inlined_call_operand.vmem [shape: f32[480,288], index: 1, kind: input, shape index: {}]
  %s2 = inlined_call_operand.hbm [shape: f32[8,128], index: 2, kind: output, shape index: {}]
  %s3 = sld [smem:[#allocation0]]
  $region18: #{tpu_custom_call.1} parent=0
    _
  %s5 = ssub.s32 1, %s3
  %s6 = scalar_select 0, %s5, %s3
  $region1: #{tpu_custom_call.1} parent=0
    #allocation2 [shape = 'u8[4096]{0}', space=vmem, size = 0x1000, scoped, tag = 'output window, operand 0, single buffered']
    #allocation3 [shape = 's32[1]{0}', space=sflag, size = 0x4, scoped, tag = 'scoped memory for tpu_custom_call.1']
    %7 = vsyncpa [#allocation3], 0
    // Predicated region
    $region2: #{tpu_custom_call.1} parent=1 // pred_check
      _
    $region3: #{tpu_custom_call.1} parent=1 // pred_check_branch
      %9 = sbr.rel (0) target = $region5
    $region4: #{tpu_custom_call.1} parent=1 // pred_region
      _
    $region5: #{tpu_custom_call.1} parent=1 // pred_fallthru
      _
    // Predicated region
    $region6: #{tpu_custom_call.1} parent=1 // pred_check
      _
    $region7: #{tpu_custom_call.1} parent=1 // pred_check_branch
      %11 = sbr.rel (0) target = $region9
    $region8: #{tpu_custom_call.1} parent=1 // pred_region
      _
    $region9: #{tpu_custom_call.1} parent=1 // pred_fallthru
      _
    %v12 = vld [vmem:[%s0] sm:$0xff]
    %v13 = vld [vmem:[%s1] sm:$0xff]
    %v14 = vld [vmem:[%s1 + $0x8] sm:$0xff]
    %v15 = vld [vmem:[%s1 + $0x10] sm:$0xff]
    %v16 = vld [vmem:[%s1 + $0x18] sm:$0xff]
    %v17 = vld [vmem:[%s1 + $0x20] sm:$0xff]
    %v18 = vld [vmem:[%s1 + $0x28] sm:$0xff]
    %v19 = vld [vmem:[%s1 + $0x30] sm:$0xff]
    %v20 = vld [vmem:[%s1 + $0x38] sm:$0xff]
    %v21 = vld [vmem:[%s1 + $0x40] sm:$0xff]
    %v22 = vld [vmem:[%s1 + $0x48] sm:$0xff]
    %v23 = vld [vmem:[%s1 + $0x50] sm:$0xff]
    %v24 = vld [vmem:[%s1 + $0x58] sm:$0xff]
    %v25 = vld [vmem:[%s1 + $0x60] sm:$0xff]
    %v26 = vld [vmem:[%s1 + $0x68] sm:$0xff]
    %v27 = vld [vmem:[%s1 + $0x70] sm:$0xff]
    %v28 = vld [vmem:[%s1 + $0x78] sm:$0xff]
    %v29 = vld [vmem:[%s1 + $0x80] sm:$0xff]
    %v30 = vld [vmem:[%s1 + $0x88] sm:$0xff]
    %v31 = vld [vmem:[%s1 + $0x90] sm:$0xff]
    %v32 = vld [vmem:[%s1 + $0x98] sm:$0xff]
    %v33 = vld [vmem:[%s1 + $0xa0] sm:$0xff]
    %v34 = vld [vmem:[%s1 + $0xa8] sm:$0xff]
    %v35 = vld [vmem:[%s1 + $0xb0] sm:$0xff]
    %v36 = vld [vmem:[%s1 + $0xb8] sm:$0xff]
    %s37 = scalar_lea.vmem %s1, 192
    %v38 = vld [vmem:[%s37] ss:$8 sm:$0x7]
    %v39 = vld [vmem:[%s1 + $0xd8] sm:$0xff]
    %v40 = vld [vmem:[%s1 + $0xf0] sm:$0xff]
    %v41 = vld [vmem:[%s1 + $0x108] sm:$0xff]
    %v42 = vld [vmem:[%s1 + $0x120] sm:$0xff]
    %v43 = vld [vmem:[%s1 + $0x138] sm:$0xff]
    %v44 = vld [vmem:[%s1 + $0x150] sm:$0xff]
    %v45 = vld [vmem:[%s1 + $0x168] sm:$0xff]
    %v46 = vld [vmem:[%s1 + $0x180] sm:$0xff]
    %v47 = vld [vmem:[%s1 + $0x198] sm:$0xff]
    %v48 = vld [vmem:[%s1 + $0x1b0] sm:$0xff]
    %v49 = vld [vmem:[%s1 + $0x1c8] sm:$0xff]
    %v50 = vld [vmem:[%s1 + $0x1e0] sm:$0xff]
    %v51 = vld [vmem:[%s1 + $0x1f8] sm:$0xff]
    %v52 = vld [vmem:[%s1 + $0x210] sm:$0xff]
    %v53 = vld [vmem:[%s1 + $0x228] sm:$0xff]
    %v54 = vld [vmem:[%s1 + $0x240] sm:$0xff]
    %v55 = vld [vmem:[%s1 + $0x258] sm:$0xff]
    %v56 = vld [vmem:[%s1 + $0x270] sm:$0xff]
    %v57 = vld [vmem:[%s1 + $0x288] sm:$0xff]
    %v58 = vld [vmem:[%s1 + $0x2a0] sm:$0xff]
    %v59 = vld [vmem:[%s1 + $0x2b8] sm:$0xff]
    %v60 = vld [vmem:[%s1 + $0x2d0] sm:$0xff]
    %v61 = vld [vmem:[%s1 + $0x2e8] sm:$0xff]
    %v62 = vld [vmem:[%s1 + $0x300] sm:$0xff]
    %v63 = vld [vmem:[%s1 + $0x318] sm:$0xff]
    %v64 = vld [vmem:[%s1 + $0x330] sm:$0xff]
    %v65 = vld [vmem:[%s1 + $0x348] sm:$0xff]
    %v66 = vld [vmem:[%s1 + $0x360] sm:$0xff]
    %v67 = vld [vmem:[%s1 + $0x378] sm:$0xff]
    %v68 = vld [vmem:[%s1 + $0x390] sm:$0xff]
    %v69 = vld [vmem:[%s1 + $0x3a8] sm:$0xff]
    %v70 = vld [vmem:[%s1 + $0x3c0] sm:$0xff]
    %v71 = vld [vmem:[%s1 + $0x3d8] sm:$0xff]
    %v72 = vld [vmem:[%s1 + $0x3f0] sm:$0xff]
    %v73 = vld [vmem:[%s1 + $0x408] sm:$0xff]
    %v74 = vld [vmem:[%s1 + $0x420] sm:$0xff]
    %v75 = vld [vmem:[%s1 + $0x438] ss:$0 sm:$0xff]
    %v76 = vld [vmem:[%s1 + $0x450] sm:$0xff]
    %v77 = vld [vmem:[%s1 + $0x468] sm:$0xff]
    %v78 = vld [vmem:[%s1 + $0x480] sm:$0xff]
    %v79 = vld [vmem:[%s1 + $0x498] sm:$0xff]
    %v80 = vld [vmem:[%s1 + $0x4b0] sm:$0xff]
    %v81 = vld [vmem:[%s1 + $0x4c8] sm:$0xff]
    %v82 = vld [vmem:[%s1 + $0x4e0] sm:$0xff]
    %v83 = vld [vmem:[%s1 + $0x4f8] sm:$0xff]
    %v84 = vld [vmem:[%s1 + $0x510] ss:$0 sm:$0xff]
    %v85 = vld [vmem:[%s1 + $0x528] sm:$0xff]
    %v86 = vld [vmem:[%s1 + $0x540] sm:$0xff]
    %v87 = vld [vmem:[%s1 + $0x558] sm:$0xff]
    %v88 = vld [vmem:[%s1 + $0x570] sm:$0xff]
    %v89 = vld [vmem:[%s1 + $0x588] ss:$0 sm:$0xff]
    %v91 = vperm.slane %v38, 0
    %v92 = vperm.slane %v38, 1
    %v93 = vperm.slane %v38, 2
    %vm97 = vcmask 523264
    %v99 = vsel %vm97, %v12, 0
    %101 = vmatpush.msra.mxu0 0.0
    %102 = vmatpush.msra.mxu0 0.0
    %103 = vmatpush.msra.mxu0 0.0
    %104 = vmatpush.msra.mxu0 0.0
    %105 = vmatpush.msra.mxu0 0.0
    %106 = vmatpush.msra.mxu0 0.0
    %107 = vmatpush.msra.mxu0 0.0
    %108 = vmatpush.msra.mxu0 0.0
    %109 = vmatpush.msra.mxu0 %v34
    %110 = vmatpush.msra.mxu0 %v31
    %111 = vmatpush.msra.mxu0 %v28
    %112 = vmatpush.msra.mxu0 %v25
    %113 = vmatpush.msra.mxu0 %v22
    %114 = vmatpush.msra.mxu0 %v19
    %115 = vmatpush.msra.mxu0 %v16
    %116 = vmatpush.msra.mxu0 %v13
    %117 = vmatmul.f32.gmra.mxu0 %v99
    %v118 = vpop.f32.mrf.mxu0
    %v119 = vadd.f32 %v91, %v118
    %120 = vdwg.mxu0
    %121 = vmatpush.msra.mxu0 0.0
    %122 = vmatpush.msra.mxu0 0.0
    %123 = vmatpush.msra.mxu0 0.0
    %124 = vmatpush.msra.mxu0 0.0
    %125 = vmatpush.msra.mxu0 0.0
    %126 = vmatpush.msra.mxu0 0.0
    %127 = vmatpush.msra.mxu0 0.0
    %128 = vmatpush.msra.mxu0 0.0
    %129 = vmatpush.msra.mxu0 %v35
    %130 = vmatpush.msra.mxu0 %v32
    %131 = vmatpush.msra.mxu0 %v29
    %132 = vmatpush.msra.mxu0 %v26
    %133 = vmatpush.msra.mxu0 %v23
    %134 = vmatpush.msra.mxu0 %v20
    %135 = vmatpush.msra.mxu0 %v17
    %136 = vmatpush.msra.mxu0 %v14
    %137 = vmatmul.f32.gmra.mxu0 %v99
    %v138 = vpop.f32.mrf.mxu0
    %v139 = vadd.f32 %v92, %v138
    %140 = vdwg.mxu0
    %141 = vmatpush.msra.mxu0 0.0
    %142 = vmatpush.msra.mxu0 0.0
    %143 = vmatpush.msra.mxu0 0.0
    %144 = vmatpush.msra.mxu0 0.0
    %145 = vmatpush.msra.mxu0 0.0
    %146 = vmatpush.msra.mxu0 0.0
    %147 = vmatpush.msra.mxu0 0.0
    %148 = vmatpush.msra.mxu0 0.0
    %149 = vmatpush.msra.mxu0 %v36
    %150 = vmatpush.msra.mxu0 %v33
    %151 = vmatpush.msra.mxu0 %v30
    %152 = vmatpush.msra.mxu0 %v27
    %153 = vmatpush.msra.mxu0 %v24
    %154 = vmatpush.msra.mxu0 %v21
    %155 = vmatpush.msra.mxu0 %v18
    %156 = vmatpush.msra.mxu0 %v15
    %157 = vmatmul.f32.gmra.mxu0 %v99
    %v158 = vpop.f32.mrf.mxu0
    %v159 = vadd.f32 %v93, %v158
    %160 = vdwg.mxu0
    %v161 = vmax.f32 %v119, 0.0
    %v162 = vmax.f32 %v139, 0.0
    %v163 = vmax.f32 %v159, 0.0
    %vm164 = vcmask 261120
    %v166 = vsel %vm164, %v163, 0
    %168 = vmatpush.msra.mxu0 %v54
    %169 = vmatpush.msra.mxu0 %v53
    %170 = vmatpush.msra.mxu0 %v52
    %171 = vmatpush.msra.mxu0 %v51
    %172 = vmatpush.msra.mxu0 %v50
    %173 = vmatpush.msra.mxu0 %v49
    %174 = vmatpush.msra.mxu0 %v48
    %175 = vmatpush.msra.mxu0 %v47
    %176 = vmatpush.msra.mxu0 %v46
    %177 = vmatpush.msra.mxu0 %v45
    %178 = vmatpush.msra.mxu0 %v44
    %179 = vmatpush.msra.mxu0 %v43
    %180 = vmatpush.msra.mxu0 %v42
    %181 = vmatpush.msra.mxu0 %v41
    %182 = vmatpush.msra.mxu0 %v40
    %183 = vmatpush.msra.mxu0 %v39
    %184 = vmatmul.f32.gmra.mxu0 %v161
    %v185 = vpop.f32.mrf.mxu0
    %v186 = vadd.f32 %v75, %v185
    %187 = vdwg.mxu0
    %188 = vmatpush.msra.mxu0 %v70
    %189 = vmatpush.msra.mxu0 %v69
    %190 = vmatpush.msra.mxu0 %v68
    %191 = vmatpush.msra.mxu0 %v67
    %192 = vmatpush.msra.mxu0 %v66
    %193 = vmatpush.msra.mxu0 %v65
    %194 = vmatpush.msra.mxu0 %v64
    %195 = vmatpush.msra.mxu0 %v63
    %196 = vmatpush.msra.mxu0 %v62
    %197 = vmatpush.msra.mxu0 %v61
    %198 = vmatpush.msra.mxu0 %v60
    %199 = vmatpush.msra.mxu0 %v59
    %200 = vmatpush.msra.mxu0 %v58
    %201 = vmatpush.msra.mxu0 %v57
    %202 = vmatpush.msra.mxu0 %v56
    %203 = vmatpush.msra.mxu0 %v55
    %204 = vmatmul.f32.gmra.mxu0 %v162
    %v205 = vpop.f32.mrf.mxu0
    %v206 = vadd.f32 %v186, %v205
    %207 = vdwg.mxu0
    %208 = vmatpush.msra.mxu0 0.0
    %209 = vmatpush.msra.mxu0 0.0
    %210 = vmatpush.msra.mxu0 0.0
    %211 = vmatpush.msra.mxu0 0.0
    %212 = vmatpush.msra.mxu0 0.0
    %213 = vmatpush.msra.mxu0 0.0
    %214 = vmatpush.msra.mxu0 0.0
    %215 = vmatpush.msra.mxu0 0.0
    %216 = vmatpush.msra.mxu0 0.0
    %217 = vmatpush.msra.mxu0 0.0
    %218 = vmatpush.msra.mxu0 0.0
    %219 = vmatpush.msra.mxu0 0.0
    %220 = vmatpush.msra.mxu0 %v74
    %221 = vmatpush.msra.mxu0 %v73
    %222 = vmatpush.msra.mxu0 %v72
    %223 = vmatpush.msra.mxu0 %v71
    %224 = vmatmul.f32.gmra.mxu0 %v166
    %v225 = vpop.f32.mrf.mxu0
    %v226 = vadd.f32 %v206, %v225
    %227 = vdwg.mxu0
    %v228 = vmax.f32 %v226, 0.0
    %v230 = vsel %vm97, %v228, 0
    %232 = vmatpush.msra.mxu0 0.0
    %233 = vmatpush.msra.mxu0 0.0
    %234 = vmatpush.msra.mxu0 0.0
    %235 = vmatpush.msra.mxu0 0.0
    %236 = vmatpush.msra.mxu0 0.0
    %237 = vmatpush.msra.mxu0 0.0
    %238 = vmatpush.msra.mxu0 0.0
    %239 = vmatpush.msra.mxu0 0.0
    %240 = vmatpush.msra.mxu0 %v83
    %241 = vmatpush.msra.mxu0 %v82
    %242 = vmatpush.msra.mxu0 %v81
    %243 = vmatpush.msra.mxu0 %v80
    %244 = vmatpush.msra.mxu0 %v79
    %245 = vmatpush.msra.mxu0 %v78
    %246 = vmatpush.msra.mxu0 %v77
    %247 = vmatpush.msra.mxu0 %v76
    %248 = vmatmul.f32.gmra.mxu0 %v230
    %v249 = vpop.f32.mrf.mxu0
    %v250 = vadd.f32 %v84, %v249
    %251 = vdwg.mxu0
    %v252 = vmax.f32 %v250, 0.0
    %v254 = vsel %vm164, %v252, 0
    %256 = vmatpush.msra.mxu0 0.0
    %257 = vmatpush.msra.mxu0 0.0
    %258 = vmatpush.msra.mxu0 0.0
    %259 = vmatpush.msra.mxu0 0.0
    %260 = vmatpush.msra.mxu0 0.0
    %261 = vmatpush.msra.mxu0 0.0
    %262 = vmatpush.msra.mxu0 0.0
    %263 = vmatpush.msra.mxu0 0.0
    %264 = vmatpush.msra.mxu0 0.0
    %265 = vmatpush.msra.mxu0 0.0
    %266 = vmatpush.msra.mxu0 0.0
    %267 = vmatpush.msra.mxu0 0.0
    %268 = vmatpush.msra.mxu0 %v88
    %269 = vmatpush.msra.mxu0 %v87
    %270 = vmatpush.msra.mxu0 %v86
    %271 = vmatpush.msra.mxu0 %v85
    %272 = vmatmul.f32.gmra.mxu0 %v254
    %v273 = vpop.f32.mrf.mxu0
    %v274 = vadd.f32 %v89, %v273
    %275 = vdwg.mxu0
    %276 = vst [vmem:[#allocation2] sm:$0xff] %v274
    // Predicated region
    $region10: #{tpu_custom_call.1} parent=1 // pred_check
      _
    $region11: #{tpu_custom_call.1} parent=1 // pred_check_branch
      %278 = sbr.rel (0) target = $region13
    $region12: #{tpu_custom_call.1} parent=1 // pred_region
      %280 = vsyncadd [#allocation3], 0
      %s282 = sshll.u32 [#allocation2], 4
      %s283 = int_to_ptr.vmem [resolvable:$true] %s282
      %s284 = sshll.u32 %s2, 4
      %s285 = int_to_ptr.hbm [resolvable:$true] %s284
      %287 = dma.vmem_to_hbm [thread:$0]  %s283, 128, %s285, [#allocation3]
    $region13: #{tpu_custom_call.1} parent=1 // pred_fallthru
      _
    // Predicated region
    $region14: #{tpu_custom_call.1} parent=1 // pred_check
      _
    $region15: #{tpu_custom_call.1} parent=1 // pred_check_branch
      %289 = sbr.rel (0) target = $region17
    $region16: #{tpu_custom_call.1} parent=1 // pred_region
      %291 = dma.done [#allocation3], 128
    $region17: #{tpu_custom_call.1} parent=1 // pred_fallthru
      _
    %292 = vsyncpa [#allocation3], 1

</llo_original>
